<compile_context>
chip_gen: v7x
topology: tpu7x:2x2x1
jax: 0.10.0
libtpu: 0.0.40
codegen_flags: <defaults>
</compile_context>

<pallas_src>
import functools

import jax
import jax.numpy as jnp
from jax.experimental import pallas as pl
from jax.experimental.pallas import tpu as pltpu


def calc_alpha(sample_sizes):
    """JAX equivalent of the PyTorch calc_alpha (use_softmax=False)."""
    inv = 1.0 / jnp.asarray(sample_sizes, dtype=jnp.float32)
    return inv / jnp.sum(inv)


def _round_up(x, m):
    return ((x + m - 1) // m) * m


def _vmem_budgets():
    """(tile_footprint_budget_bytes, vmem_limit_bytes), generation-aware."""
    cap = 64 * 1024 * 1024            # conservative default (v7x per-core VMEM)
    try:
        info = pltpu.get_tpu_info()
        cap_q = int(getattr(info, "vmem_capacity_bytes", 0) or 0)
        if cap_q > 0:
            cap = cap_q
    except Exception:
        pass
    cap = min(max(cap, 32 * 1024 * 1024), 128 * 1024 * 1024)
    tile_budget = int(cap * 0.40)                       # estimated tile footprint
    vmem_limit = min(int(cap * 0.70), 100 * 1024 * 1024)  # scoped VMEM we request
    return tile_budget, vmem_limit


def _choose_tiles(n, c, itemsize, tile_budget):
    """Pick (tn, tc): batch-tile rows and class-chunk width.

    Per-row footprint counts: 2x double-buffered logits over the lane-padded
    chunk, ~4 f32 temporaries over the chunk, 2x lane-padded targets + alpha_t
    streams, and 3 (tn,1) f32 scratch rows (all lane-padded to 128).
    """
    c_pad = _round_up(c, 128)
    fixed_row_bytes = (2 + 2 + 3) * 128 * 4

    def row_bytes(tc_pad):
        return 2 * tc_pad * itemsize + 4 * tc_pad * 4 + fixed_row_bytes

    # Path 1: whole class dimension as a single chunk.
    tn = tile_budget // row_bytes(c_pad)
    if tn >= min(n, 8):
        tn = min(tn, n)
        if tn < n:
            tn = (tn // 8) * 8
        return int(tn), int(c)

    # Path 2: class dim too wide -> chunk classes, online logsumexp across chunks.
    tn = min(n, 512)
    if tn < n:
        tn = max(8, (tn // 8) * 8)
    tc_pad = (tile_budget // tn - fixed_row_bytes) // (2 * itemsize + 4 * 4)
    tc_pad = max(128, (tc_pad // 128) * 128)
    if tc_pad >= c_pad:
        return int(tn), int(c)
    return int(tn), int(tc_pad)


# Two accumulator slots = one per v7x TensorCore (leading "parallel" axis).
# On 1-TC chips (v5e/v6e) this only adds at most one fully-masked padding tile.
_NUM_ACC_SLOTS = 2


def _focal_loss_kernel(x_ref, t_ref, a_ref, out_ref, m_ref, s_ref, xt_ref, *,
                       gamma, tn, tc, c, n, tiles_per_slot, needs_col_mask):
    p = pl.program_id(0)          # accumulator slot (parallel)
    i = pl.program_id(1)          # batch tile within slot
    j = pl.program_id(2)          # class chunk
    n_chunks = pl.num_programs(2)

    @pl.when((i == 0) & (j == 0))
    def _init_out():
        out_ref[...] = jnp.zeros_like(out_ref)

    @pl.when(j == 0)
    def _init_row_state():
        m_ref[...] = jnp.full_like(m_ref, -jnp.inf)
        s_ref[...] = jnp.zeros_like(s_ref)
        xt_ref[...] = jnp.zeros_like(xt_ref)

    x = x_ref[...].astype(jnp.float32)            # (tn, tc), cast in-kernel
    t = t_ref[...]                                # (tn, 1) int32 targets

    col_ids = j * tc + jax.lax.broadcasted_iota(jnp.int32, (tn, tc), 1)
    if needs_col_mask:
        # Last class chunk over-reads past C: mask padded columns (NaN-safe).
        x_valid = jnp.where(col_ids < c, x, -jnp.inf)
    else:
        x_valid = x

    # Online logsumexp update (per-row running max / sum).
    m_prev = m_ref[...]
    m_new = jnp.maximum(m_prev, jnp.max(x_valid, axis=1, keepdims=True))
    s_ref[...] = (s_ref[...] * jnp.exp(m_prev - m_new)
                  + jnp.sum(jnp.exp(x_valid - m_new), axis=1, keepdims=True))
    m_ref[...] = m_new

    # Fused one-hot gather of the target logit (no materialized mask).
    xt_ref[...] += jnp.sum(jnp.where(col_ids == t, x, 0.0),
                           axis=1, keepdims=True)

    @pl.when(j == n_chunks - 1)
    def _finish_tile():
        alpha_t = a_ref[...]                       # (tn, 1) f32, gathered in wrapper
        log_z = m_ref[...] + jnp.log(s_ref[...])
        log_p = xt_ref[...] - log_z                # log P[target]
        probs = jnp.exp(log_p)
        loss_rows = -alpha_t * (1.0 - probs) ** gamma * log_p   # gamma static int

        # Mask padded rows (last real tile and fully-padded slot tiles). Uses the
        # UNCLAMPED global tile index so duplicated clamped reads contribute 0.
        row_ids = (p * tiles_per_slot + i) * tn + \
            jax.lax.broadcasted_iota(jnp.int32, (tn, 1), 0)
        loss_rows = jnp.where(row_ids < n, loss_rows, 0.0)

        out_ref[...] += jnp.sum(loss_rows).reshape(1, 1, 1)


def focal_loss(inputs, targets, alpha, *, gamma=2, size_average=True,
               _force_tiles=None):
    """inputs: (N, C) logits (any float dtype); targets: (N,) int; alpha: (C,)."""
    n, c = inputs.shape
    targets_2d = targets.reshape(n, 1).astype(jnp.int32)
    alpha_arr = jnp.asarray(alpha, jnp.float32).reshape(c)
    # Hoisted alpha gather: trivial N-element XLA gather in the wrapper.
    alpha_t = alpha_arr[targets_2d[:, 0]].reshape(n, 1)

    itemsize = jnp.dtype(inputs.dtype).itemsize
    tile_budget, vmem_limit = _vmem_budgets()
    if _force_tiles is not None:
        tn, tc = _force_tiles
    else:
        tn, tc = _choose_tiles(n, c, itemsize, tile_budget)

    num_tiles = pl.cdiv(n, tn)
    tiles_per_slot = pl.cdiv(num_tiles, _NUM_ACC_SLOTS)
    c_chunks = pl.cdiv(c, tc)

    def tile_idx(p, i):
        # Clamp so padding tiles of the last slot never issue OOB DMAs; their
        # rows are masked out in-kernel via the unclamped row index.
        return jnp.minimum(p * tiles_per_slot + i, num_tiles - 1)

    kernel = functools.partial(
        _focal_loss_kernel,
        gamma=gamma, tn=tn, tc=tc, c=c, n=n,
        tiles_per_slot=tiles_per_slot,
        needs_col_mask=(c % tc != 0),
    )

    partials = pl.pallas_call(
        kernel,
        out_shape=jax.ShapeDtypeStruct((_NUM_ACC_SLOTS, 1, 1), jnp.float32),
        grid_spec=pltpu.PrefetchScalarGridSpec(
            num_scalar_prefetch=0,
            grid=(_NUM_ACC_SLOTS, tiles_per_slot, c_chunks),
            in_specs=[
                pl.BlockSpec((tn, tc), lambda p, i, j: (tile_idx(p, i), j)),  # logits
                pl.BlockSpec((tn, 1), lambda p, i, j: (tile_idx(p, i), 0)),   # targets
                pl.BlockSpec((tn, 1), lambda p, i, j: (tile_idx(p, i), 0)),   # alpha_t
            ],
            out_specs=pl.BlockSpec((1, 1, 1), lambda p, i, j: (p, 0, 0)),
            scratch_shapes=[pltpu.VMEM((tn, 1), jnp.float32)] * 3,  # m, s, x_t
        ),
        compiler_params=pltpu.CompilerParams(
            dimension_semantics=("parallel", "arbitrary", "arbitrary"),
            vmem_limit_bytes=int(vmem_limit),
        ),
    )(inputs, targets_2d, alpha_t)

    total = jnp.sum(partials)              # reduce per-slot partials in wrapper
    return total / n if size_average else total


def focal_loss_ref(inputs, targets, alpha, *, gamma=2, size_average=True):
    """Pure-JAX reference for sanity checking."""
    p = jax.nn.softmax(inputs.astype(jnp.float32), axis=1)
    probs = jnp.take_along_axis(p, targets[:, None].astype(jnp.int32), axis=1)
    alpha_t = jnp.asarray(alpha, jnp.float32)[targets][:, None]
    batch_loss = -alpha_t * (1.0 - probs) ** gamma * jnp.log(probs)
    return jnp.mean(batch_loss) if size_average else jnp.sum(batch_loss)


if __name__ == "__main__":
    # Test 1: module-like setup (4 classes, single class chunk, mean reduction).
    sample_sizes = [100.0, 200.0, 50.0, 400.0]
    alpha = calc_alpha(sample_sizes)                 # (4,)
    N, C = 8, 4
    key = jax.random.PRNGKey(0)
    k_in, k_tg = jax.random.split(key)
    inputs = jax.random.normal(k_in, (N, C), dtype=jnp.float32)
    targets = jax.random.randint(k_tg, (N,), 0, C, dtype=jnp.int32)

    loss = jax.block_until_ready(
        focal_loss(inputs, targets, alpha, gamma=2, size_average=True))
    ref = focal_loss_ref(inputs, targets, alpha, gamma=2, size_average=True)
    assert jnp.allclose(loss, ref, rtol=1e-5, atol=1e-6), (loss, ref)

    # Test 2: exercise the class-chunked online-logsumexp path, the partial last
    # chunk (column masking, C=200 with tc=128) and both accumulator slots.
    N2, C2 = 16, 200
    k1, k2, k3 = jax.random.split(jax.random.PRNGKey(0), 3)
    sizes2 = jax.random.uniform(k1, (C2,), minval=10.0, maxval=500.0)
    alpha2 = calc_alpha(sizes2)
    inputs2 = jax.random.normal(k2, (N2, C2), dtype=jnp.float32)
    targets2 = jax.random.randint(k3, (N2,), 0, C2, dtype=jnp.int32)

    loss2 = jax.block_until_ready(
        focal_loss(inputs2, targets2, alpha2, gamma=2, size_average=False,
                   _force_tiles=(8, 128)))
    ref2 = focal_loss_ref(inputs2, targets2, alpha2, gamma=2, size_average=False)
    assert jnp.allclose(loss2, ref2, rtol=2e-5, atol=1e-5), (loss2, ref2)

    print("KERNEL_OK")
</pallas_src>

<mosaic_0001>
module attributes {stable_mosaic.version = 11 : i64} {
  func.func @_focal_loss_kernel(%arg0: i32, %arg1: i32, %arg2: i32, %arg3: memref<8x4xf32, #tpu.memory_space<vmem>>, %arg4: memref<8x1xi32, #tpu.memory_space<vmem>>, %arg5: memref<8x1xf32, #tpu.memory_space<vmem>>, %arg6: memref<1x1x1xf32, #tpu.memory_space<vmem>>, %arg7: memref<8x1xf32, #tpu.memory_space<vmem>>, %arg8: memref<8x1xf32, #tpu.memory_space<vmem>>, %arg9: memref<8x1xf32, #tpu.memory_space<vmem>>) attributes {dimension_semantics = [#tpu.dimension_semantics<parallel>, #tpu.dimension_semantics<arbitrary>, #tpu.dimension_semantics<arbitrary>], iteration_bounds = array<i64: 2, 1, 1>, scalar_prefetch = 0 : i64, scratch_operands = 3 : i64, tpu.core_type = #tpu.core_type<tc>, window_params = [{transform_indices = @transform_0, window_bounds = array<i64: 8, 4>}, {transform_indices = @transform_1, window_bounds = array<i64: 8, 1>}, {transform_indices = @transform_2, window_bounds = array<i64: 8, 1>}, {transform_indices = @transform_3, window_bounds = array<i64: 1, 1, 1>}]} {
    %c0_i32 = arith.constant 0 : i32
    %0 = arith.cmpi eq, %arg1, %c0_i32 : i32
    %c0_i32_0 = arith.constant 0 : i32
    %1 = arith.cmpi eq, %arg2, %c0_i32_0 : i32
    %2 = arith.andi %0, %1 : i1
    %3 = arith.extui %2 : i1 to i32
    %c0_i32_1 = arith.constant 0 : i32
    %4 = arith.cmpi ne, %3, %c0_i32_1 : i32
    scf.if %4 {
      %cst_24 = arith.constant 0.000000e+00 : f32
      %42 = vector.broadcast %cst_24 : f32 to vector<1x1x1xf32>
      %c0_25 = arith.constant 0 : index
      %c0_26 = arith.constant 0 : index
      %c0_27 = arith.constant 0 : index
      %43 = vector.load %arg6[%c0_25, %c0_26, %c0_27] : memref<1x1x1xf32, #tpu.memory_space<vmem>>, vector<1x1x1xf32>
      tpu.vector_store %arg6[%c0_25, %c0_26, %c0_27], %42 {strides = array<i32>} : memref<1x1x1xf32, #tpu.memory_space<vmem>>, vector<1x1x1xf32>,
    } else {
    }
    %c0_i32_2 = arith.constant 0 : i32
    %5 = arith.cmpi eq, %arg2, %c0_i32_2 : i32
    %6 = arith.extui %5 : i1 to i32
    %c0_i32_3 = arith.constant 0 : i32
    %7 = arith.cmpi ne, %6, %c0_i32_3 : i32
    scf.if %7 {
      %cst_24 = arith.constant 0xFF800000 : f32
      %42 = vector.broadcast %cst_24 : f32 to vector<8x1xf32>
      %c0_25 = arith.constant 0 : index
      %c0_26 = arith.constant 0 : index
      %43 = vector.load %arg7[%c0_25, %c0_26] : memref<8x1xf32, #tpu.memory_space<vmem>>, vector<8x1xf32>
      tpu.vector_store %arg7[%c0_25, %c0_26], %42 {strides = array<i32>} : memref<8x1xf32, #tpu.memory_space<vmem>>, vector<8x1xf32>,
      %cst_27 = arith.constant 0.000000e+00 : f32
      %44 = vector.broadcast %cst_27 : f32 to vector<8x1xf32>
      %c0_28 = arith.constant 0 : index
      %c0_29 = arith.constant 0 : index
      %45 = vector.load %arg8[%c0_28, %c0_29] : memref<8x1xf32, #tpu.memory_space<vmem>>, vector<8x1xf32>
      tpu.vector_store %arg8[%c0_28, %c0_29], %44 {strides = array<i32>} : memref<8x1xf32, #tpu.memory_space<vmem>>, vector<8x1xf32>,
      %cst_30 = arith.constant 0.000000e+00 : f32
      %46 = vector.broadcast %cst_30 : f32 to vector<8x1xf32>
      %c0_31 = arith.constant 0 : index
      %c0_32 = arith.constant 0 : index
      %47 = vector.load %arg9[%c0_31, %c0_32] : memref<8x1xf32, #tpu.memory_space<vmem>>, vector<8x1xf32>
      tpu.vector_store %arg9[%c0_31, %c0_32], %46 {strides = array<i32>} : memref<8x1xf32, #tpu.memory_space<vmem>>, vector<8x1xf32>,
    } else {
    }
    %c0 = arith.constant 0 : index
    %c0_4 = arith.constant 0 : index
    %8 = vector.load %arg3[%c0, %c0_4] : memref<8x4xf32, #tpu.memory_space<vmem>>, vector<8x4xf32>
    %c0_5 = arith.constant 0 : index
    %c0_6 = arith.constant 0 : index
    %9 = vector.load %arg4[%c0_5, %c0_6] : memref<8x1xi32, #tpu.memory_space<vmem>>, vector<8x1xi32>
    %c4_i32 = arith.constant 4 : i32
    %10 = arith.muli %arg2, %c4_i32 : i32
    %11 = tpu.iota {dimensions = array<i32: 1>} : vector<8x4xi32>
    %12 = vector.broadcast %10 : i32 to vector<8x4xi32>
    %13 = arith.addi %12, %11 : vector<8x4xi32>
    %c0_7 = arith.constant 0 : index
    %c0_8 = arith.constant 0 : index
    %14 = vector.load %arg7[%c0_7, %c0_8] : memref<8x1xf32, #tpu.memory_space<vmem>>, vector<8x1xf32>
    %cst = arith.constant dense<0xFF800000> : vector<8xf32>
    %15 = vector.multi_reduction <maximumf>, %8, %cst [1] : vector<8x4xf32> to vector<8xf32>
    %16 = vector.shape_cast %15 : vector<8xf32> to vector<8x1xf32>
    %17 = arith.maximumf %14, %16 : vector<8x1xf32>
    %c0_9 = arith.constant 0 : index
    %c0_10 = arith.constant 0 : index
    %18 = vector.load %arg8[%c0_9, %c0_10] : memref<8x1xf32, #tpu.memory_space<vmem>>, vector<8x1xf32>
    %19 = arith.subf %14, %17 : vector<8x1xf32>
    %20 = math.exp %19 : vector<8x1xf32>
    %21 = arith.mulf %18, %20 : vector<8x1xf32>
    %22 = vector.broadcast %17 : vector<8x1xf32> to vector<8x4xf32>
    %23 = arith.subf %8, %22 : vector<8x4xf32>
    %24 = math.exp %23 : vector<8x4xf32>
    %cst_11 = arith.constant dense<0.000000e+00> : vector<8xf32>
    %25 = vector.multi_reduction <add>, %24, %cst_11 [1] : vector<8x4xf32> to vector<8xf32>
    %26 = vector.shape_cast %25 : vector<8xf32> to vector<8x1xf32>
    %27 = arith.addf %21, %26 : vector<8x1xf32>
    %c0_12 = arith.constant 0 : index
    %c0_13 = arith.constant 0 : index
    %28 = vector.load %arg8[%c0_12, %c0_13] : memref<8x1xf32, #tpu.memory_space<vmem>>, vector<8x1xf32>
    tpu.vector_store %arg8[%c0_12, %c0_13], %27 {strides = array<i32>} : memref<8x1xf32, #tpu.memory_space<vmem>>, vector<8x1xf32>,
    %c0_14 = arith.constant 0 : index
    %c0_15 = arith.constant 0 : index
    %29 = vector.load %arg7[%c0_14, %c0_15] : memref<8x1xf32, #tpu.memory_space<vmem>>, vector<8x1xf32>
    tpu.vector_store %arg7[%c0_14, %c0_15], %17 {strides = array<i32>} : memref<8x1xf32, #tpu.memory_space<vmem>>, vector<8x1xf32>,
    %c0_16 = arith.constant 0 : index
    %c0_17 = arith.constant 0 : index
    %30 = vector.load %arg9[%c0_16, %c0_17] : memref<8x1xf32, #tpu.memory_space<vmem>>, vector<8x1xf32>
    %31 = vector.broadcast %9 : vector<8x1xi32> to vector<8x4xi32>
    %32 = arith.cmpi eq, %13, %31 : vector<8x4xi32>
    %cst_18 = arith.constant 0.000000e+00 : f32
    %33 = vector.broadcast %cst_18 : f32 to vector<8x4xf32>
    %34 = arith.select %32, %8, %33 : vector<8x4xi1>, vector<8x4xf32>
    %cst_19 = arith.constant dense<0.000000e+00> : vector<8xf32>
    %35 = vector.multi_reduction <add>, %34, %cst_19 [1] : vector<8x4xf32> to vector<8xf32>
    %36 = vector.shape_cast %35 : vector<8xf32> to vector<8x1xf32>
    %37 = arith.addf %30, %36 : vector<8x1xf32>
    %c0_20 = arith.constant 0 : index
    %c0_21 = arith.constant 0 : index
    %38 = vector.load %arg9[%c0_20, %c0_21] : memref<8x1xf32, #tpu.memory_space<vmem>>, vector<8x1xf32>
    tpu.vector_store %arg9[%c0_20, %c0_21], %37 {strides = array<i32>} : memref<8x1xf32, #tpu.memory_space<vmem>>, vector<8x1xf32>,
    %c0_i32_22 = arith.constant 0 : i32
    %39 = arith.cmpi eq, %arg2, %c0_i32_22 : i32
    %40 = arith.extui %39 : i1 to i32
    %c0_i32_23 = arith.constant 0 : i32
    %41 = arith.cmpi ne, %40, %c0_i32_23 : i32
    scf.if %41 {
      %c0_24 = arith.constant 0 : index
      %c0_25 = arith.constant 0 : index
      %42 = vector.load %arg5[%c0_24, %c0_25] : memref<8x1xf32, #tpu.memory_space<vmem>>, vector<8x1xf32>
      %c0_26 = arith.constant 0 : index
      %c0_27 = arith.constant 0 : index
      %43 = vector.load %arg7[%c0_26, %c0_27] : memref<8x1xf32, #tpu.memory_space<vmem>>, vector<8x1xf32>
      %c0_28 = arith.constant 0 : index
      %c0_29 = arith.constant 0 : index
      %44 = vector.load %arg8[%c0_28, %c0_29] : memref<8x1xf32, #tpu.memory_space<vmem>>, vector<8x1xf32>
      %45 = math.log %44 : vector<8x1xf32>
      %46 = arith.addf %43, %45 : vector<8x1xf32>
      %c0_30 = arith.constant 0 : index
      %c0_31 = arith.constant 0 : index
      %47 = vector.load %arg9[%c0_30, %c0_31] : memref<8x1xf32, #tpu.memory_space<vmem>>, vector<8x1xf32>
      %48 = arith.subf %47, %46 : vector<8x1xf32>
      %49 = math.exp %48 : vector<8x1xf32>
      %cst_32 = arith.constant 0.000000e+00 : f32
      %50 = vector.broadcast %cst_32 : f32 to vector<8x1xf32>
      %51 = arith.subf %50, %42 : vector<8x1xf32>
      %cst_33 = arith.constant 1.000000e+00 : f32
      %52 = vector.broadcast %cst_33 : f32 to vector<8x1xf32>
      %53 = arith.subf %52, %49 : vector<8x1xf32>
      %54 = arith.mulf %53, %53 : vector<8x1xf32>
      %55 = arith.mulf %51, %54 : vector<8x1xf32>
      %56 = arith.mulf %55, %48 : vector<8x1xf32>
      %c1_i32 = arith.constant 1 : i32
      %57 = arith.muli %arg0, %c1_i32 : i32
      %58 = arith.addi %57, %arg1 : i32
      %c8_i32 = arith.constant 8 : i32
      %59 = arith.muli %58, %c8_i32 : i32
      %60 = tpu.iota {dimensions = array<i32: 0>} : vector<8x1xi32>
      %61 = vector.broadcast %59 : i32 to vector<8x1xi32>
      %62 = arith.addi %61, %60 : vector<8x1xi32>
      %c8_i32_34 = arith.constant 8 : i32
      %63 = vector.broadcast %c8_i32_34 : i32 to vector<8x1xi32>
      %64 = arith.cmpi slt, %62, %63 : vector<8x1xi32>
      %cst_35 = arith.constant 0.000000e+00 : f32
      %65 = vector.broadcast %cst_35 : f32 to vector<8x1xf32>
      %66 = arith.select %64, %56, %65 : vector<8x1xi1>, vector<8x1xf32>
      %c0_36 = arith.constant 0 : index
      %c0_37 = arith.constant 0 : index
      %c0_38 = arith.constant 0 : index
      %67 = vector.load %arg6[%c0_36, %c0_37, %c0_38] : memref<1x1x1xf32, #tpu.memory_space<vmem>>, vector<1x1x1xf32>
      %68 = vector.shape_cast %66 : vector<8x1xf32> to vector<1x8x1xf32>
      %cst_39 = arith.constant dense<0.000000e+00> : vector<1xf32>
      %69 = vector.multi_reduction <add>, %68, %cst_39 [1, 2] : vector<1x8x1xf32> to vector<1xf32>
      %70 = vector.shape_cast %69 : vector<1xf32> to vector<1x1x1xf32>
      %71 = vector.extract %70[0, 0, 0] : f32 from vector<1x1x1xf32>
      %72 = vector.broadcast %71 : f32 to vector<1x1x1xf32>
      %73 = arith.addf %67, %72 : vector<1x1x1xf32>
      %c0_40 = arith.constant 0 : index
      %c0_41 = arith.constant 0 : index
      %c0_42 = arith.constant 0 : index
      %74 = vector.load %arg6[%c0_40, %c0_41, %c0_42] : memref<1x1x1xf32, #tpu.memory_space<vmem>>, vector<1x1x1xf32>
      tpu.vector_store %arg6[%c0_40, %c0_41, %c0_42], %73 {strides = array<i32>} : memref<1x1x1xf32, #tpu.memory_space<vmem>>, vector<1x1x1xf32>,
    } else {
    }
    return
  }
  func.func @transform_0(%arg0: i32, %arg1: i32, %arg2: i32) -> (i32, i32) {
    %c1_i32 = arith.constant 1 : i32
    %0 = arith.muli %arg0, %c1_i32 : i32
    %1 = arith.addi %0, %arg1 : i32
    %c0_i32 = arith.constant 0 : i32
    %2 = arith.minsi %1, %c0_i32 : i32
    %c0_i32_0 = arith.constant 0 : i32
    return %2, %arg2 : i32, i32
  }
  func.func @transform_1(%arg0: i32, %arg1: i32, %arg2: i32) -> (i32, i32) {
    %c1_i32 = arith.constant 1 : i32
    %0 = arith.muli %arg0, %c1_i32 : i32
    %1 = arith.addi %0, %arg1 : i32
    %c0_i32 = arith.constant 0 : i32
    %2 = arith.minsi %1, %c0_i32 : i32
    %c0_i32_0 = arith.constant 0 : i32
    %c0_i32_1 = arith.constant 0 : i32
    return %2, %c0_i32_0 : i32, i32
  }
  func.func @transform_2(%arg0: i32, %arg1: i32, %arg2: i32) -> (i32, i32) {
    %c1_i32 = arith.constant 1 : i32
    %0 = arith.muli %arg0, %c1_i32 : i32
    %1 = arith.addi %0, %arg1 : i32
    %c0_i32 = arith.constant 0 : i32
    %2 = arith.minsi %1, %c0_i32 : i32
    %c0_i32_0 = arith.constant 0 : i32
    %c0_i32_1 = arith.constant 0 : i32
    return %2, %c0_i32_0 : i32, i32
  }
  func.func @transform_3(%arg0: i32, %arg1: i32, %arg2: i32) -> (i32, i32, i32) {
    %c0_i32 = arith.constant 0 : i32
    %c0_i32_0 = arith.constant 0 : i32
    %c0_i32_1 = arith.constant 0 : i32
    return %arg0, %c0_i32, %c0_i32_0 : i32, i32, i32
  }
}

</mosaic_0001>

<llo_original>
// kernel: tpu_custom_call.1
$region0: #{tpu_custom_call.1}
  #allocation0 [shape = 'u32[]', space=smem, size = 0x4, offset = 0x4, fixed_abs, tag = 'smem constant byte address 0x4 - core index']
  #allocation1 [shape = 'u32[144,128]{1,0:T(1,128)}', space=vmem, size = 0x12000, scoped, tag = 'internal scratch']
  #allocation2 [shape = 'f32[8,1]{1,0:T(8,128)}', space=vmem, size = 0x1000, scoped, tag = 'scratch operand']
  #allocation3 [shape = 'f32[8,1]{1,0:T(8,128)}', space=vmem, size = 0x1000, scoped, tag = 'scratch operand']
  #allocation4 [shape = 'f32[8,1]{1,0:T(8,128)}', space=vmem, size = 0x1000, scoped, tag = 'scratch operand']
  %s0 = inlined_call_operand.vmem [shape: f32[8,4], index: 0, kind: input, shape index: {}]
  %s1 = inlined_call_operand.vmem [shape: s32[8,1], index: 1, kind: input, shape index: {}]
  %s2 = inlined_call_operand.vmem [shape: f32[8,1], index: 2, kind: input, shape index: {}]
  %s3 = inlined_call_operand.vmem [shape: f32[2,1,1], index: 3, kind: output, shape index: {}]
  %s4 = sld [smem:[#allocation0]]
  $region57: #{tpu_custom_call.1} parent=0
    _
  %s6 = ssub.s32 1, %s4
  %s7 = scalar_select 0, %s6, %s4
  loop: start=0, step=1, limit=4
  $region2: #{tpu_custom_call.1} parent=0 // loop_pre_header
    _
  $region3: #{tpu_custom_call.1} parent=0 // loop_header
    %s9 = sphi 0, %s13
    %p10 = scmp.ge.s32.totalorder %s9, 4
    %s16 = sphi 0, %s35
    %s17 = sphi 0, %s31
    %s18 = sphi 0, %s27
    %s19 = sphi 0, %s16
    %s20 = sphi 0, %s17
    %s21 = sphi 0, %s18
    %s22 = sphi 0, %s19
    %s23 = sphi 0, %s20
    %s24 = sphi 0, %s21
    %s46 = sphi 0, %s48
    %s49 = sphi 0, %s46
    %s50 = sphi 0, %s49
    %s66 = sphi 0, %s50
    %s78 = sphi 0, %s80
    %s81 = sphi 0, %s78
    %s82 = sphi 0, %s81
    %s98 = sphi 0, %s82
    %s110 = sphi 0, %s112
    %s113 = sphi 0, %s110
    %s114 = sphi 0, %s113
    %s130 = sphi 0, %s114
    %s136 = sphi 0, %s138
    %s139 = sphi 0, %s136
    %s140 = sphi 0, %s139
    %s156 = sphi 0, %s140
  $region4: #{tpu_custom_call.1} parent=0 // loop_header_branch
    %12 = sbr.rel (%p10) target = $region8
  $region5: #{tpu_custom_call.1} parent=0 // loop_body
    %s14 = ssub.s32 %s9, 1
    %s15 = ssub.s32 %s9, 2
    %s25 = sadd.s32 1, %s18
    %p26 = scmp.ge.s32.totalorder %s25, 1
    %s27 = scalar_select %p26, 0, %s25
    %s28 = sadd.s32 1, %s17
    %s29 = scalar_select %p26, %s28, %s17
    %p30 = scmp.ge.s32.totalorder %s29, 1
    %s31 = scalar_select %p30, 0, %s29
    %s32 = sadd.s32 1, %s16
    %s33 = scalar_select %p30, %s32, %s16
    %p34 = scmp.ge.s32.totalorder %s33, 2
    %s35 = scalar_select %p34, 0, %s33
    %s36 = sadd.s32 %s16, %s17
    %p37 = scmp.lt.s32.totalorder %s36, 0
    %s38 = scalar_select %p37, %s36, 0
    %s39 = sadd.s32 %s35, %s31
    %p40 = scmp.lt.s32.totalorder %s39, 0
    %s41 = scalar_select %p40, %s39, 0
    %s42 = ssub.s32 %s38, %s41
    %s43 = ssub.s32 %s18, %s27
    %s44 = sor.u32 %s42, %s43
    %p45 = scmp.eq.s32.totalorder %s44, 0
    %s47 = sadd.s32 %s46, 1
    %s48 = scalar_select %p45, %s46, %s47
    %p51 = pneg %p45
    %p52 = scmp.eq.s32.totalorder %s9, 1
    %p53 = por %p51, %p52
    %p54 = scmp.ne.s32.totalorder %s46, %s49
    %p55 = scmp.eq.s32.totalorder %s9, 0
    %p56 = por %p54, %p55
    %p57 = scmp.ne.s32.totalorder %s46, %s49
    %p58 = scmp.eq.s32.totalorder %s14, 1
    %p59 = por %p57, %p58
    %p60 = scmp.ne.s32.totalorder %s49, %s50
    %p61 = scmp.eq.s32.totalorder %s14, 0
    %p62 = por %p60, %p61
    %p63 = scmp.ne.s32.totalorder %s49, %s50
    %p64 = scmp.eq.s32.totalorder %s15, 1
    %p65 = por %p63, %p64
    %p67 = scmp.ne.s32.totalorder %s50, %s66
    %p68 = scmp.eq.s32.totalorder %s15, 0
    %p69 = por %p67, %p68
    %s70 = sadd.s32 %s16, %s17
    %p71 = scmp.lt.s32.totalorder %s70, 0
    %s72 = scalar_select %p71, %s70, 0
    %s73 = sadd.s32 %s35, %s31
    %p74 = scmp.lt.s32.totalorder %s73, 0
    %s75 = scalar_select %p74, %s73, 0
    %s76 = ssub.s32 %s72, %s75
    %p77 = scmp.eq.s32.totalorder %s76, 0
    %s79 = sadd.s32 %s78, 1
    %s80 = scalar_select %p77, %s78, %s79
    %p83 = pneg %p77
    %p84 = scmp.eq.s32.totalorder %s9, 1
    %p85 = por %p83, %p84
    %p86 = scmp.ne.s32.totalorder %s78, %s81
    %p87 = scmp.eq.s32.totalorder %s9, 0
    %p88 = por %p86, %p87
    %p89 = scmp.ne.s32.totalorder %s78, %s81
    %p90 = scmp.eq.s32.totalorder %s14, 1
    %p91 = por %p89, %p90
    %p92 = scmp.ne.s32.totalorder %s81, %s82
    %p93 = scmp.eq.s32.totalorder %s14, 0
    %p94 = por %p92, %p93
    %p95 = scmp.ne.s32.totalorder %s81, %s82
    %p96 = scmp.eq.s32.totalorder %s15, 1
    %p97 = por %p95, %p96
    %p99 = scmp.ne.s32.totalorder %s82, %s98
    %p100 = scmp.eq.s32.totalorder %s15, 0
    %p101 = por %p99, %p100
    %s102 = sadd.s32 %s16, %s17
    %p103 = scmp.lt.s32.totalorder %s102, 0
    %s104 = scalar_select %p103, %s102, 0
    %s105 = sadd.s32 %s35, %s31
    %p106 = scmp.lt.s32.totalorder %s105, 0
    %s107 = scalar_select %p106, %s105, 0
    %s108 = ssub.s32 %s104, %s107
    %p109 = scmp.eq.s32.totalorder %s108, 0
    %s111 = sadd.s32 %s110, 1
    %s112 = scalar_select %p109, %s110, %s111
    %p115 = pneg %p109
    %p116 = scmp.eq.s32.totalorder %s9, 1
    %p117 = por %p115, %p116
    %p118 = scmp.ne.s32.totalorder %s110, %s113
    %p119 = scmp.eq.s32.totalorder %s9, 0
    %p120 = por %p118, %p119
    %p121 = scmp.ne.s32.totalorder %s110, %s113
    %p122 = scmp.eq.s32.totalorder %s14, 1
    %p123 = por %p121, %p122
    %p124 = scmp.ne.s32.totalorder %s113, %s114
    %p125 = scmp.eq.s32.totalorder %s14, 0
    %p126 = por %p124, %p125
    %p127 = scmp.ne.s32.totalorder %s113, %s114
    %p128 = scmp.eq.s32.totalorder %s15, 1
    %p129 = por %p127, %p128
    %p131 = scmp.ne.s32.totalorder %s114, %s130
    %p132 = scmp.eq.s32.totalorder %s15, 0
    %p133 = por %p131, %p132
    %s134 = ssub.s32 %s16, %s35
    %p135 = scmp.eq.s32.totalorder %s134, 0
    %s137 = sadd.s32 %s136, 1
    %s138 = scalar_select %p135, %s136, %s137
    %p141 = pneg %p135
    %p142 = scmp.eq.s32.totalorder %s9, 1
    %p143 = por %p141, %p142
    %p144 = scmp.ne.s32.totalorder %s136, %s139
    %p145 = scmp.eq.s32.totalorder %s9, 0
    %p146 = por %p144, %p145
    %p147 = scmp.ne.s32.totalorder %s136, %s139
    %p148 = scmp.eq.s32.totalorder %s14, 1
    %p149 = por %p147, %p148
    %p150 = scmp.ne.s32.totalorder %s139, %s140
    %p151 = scmp.eq.s32.totalorder %s14, 0
    %p152 = por %p150, %p151
    %p153 = scmp.ne.s32.totalorder %s139, %s140
    %p154 = scmp.eq.s32.totalorder %s15, 1
    %p155 = por %p153, %p154
    %p157 = scmp.ne.s32.totalorder %s140, %s156
    %p158 = scmp.eq.s32.totalorder %s15, 0
    %p159 = por %p157, %p158
    %p160 = scmp.le.s32.totalorder 1, %s9
    %p161 = scmp.lt.s32.totalorder %s9, 3
    %p162 = pnand %p160, %p161
    %p163 = pneg %p162
    // Predicated region
    $region9: #{tpu_custom_call.1} parent=5 // pred_check
      _
    $region10: #{tpu_custom_call.1} parent=5 // pred_check_branch
      %165 = sbr.rel (%p162) target = $region12
    $region11: #{tpu_custom_call.1} parent=5 // pred_region
      %s166 = ssub.s32 %s9, 1
    $region12: #{tpu_custom_call.1} parent=5 // pred_fallthru
      _
    %p167 = scmp.lt.s32.totalorder %s9, 2
    // Predicated region
    $region13: #{tpu_custom_call.1} parent=5 // pred_check
      %p168 = pneg %p167
    $region14: #{tpu_custom_call.1} parent=5 // pred_check_branch
      %170 = sbr.rel (%p168) target = $region16
    $region15: #{tpu_custom_call.1} parent=5 // pred_region
      // Predicated region
      $region17: #{tpu_custom_call.1} parent=15 // pred_check
        %p171 = pneg %p56
      $region18: #{tpu_custom_call.1} parent=15 // pred_check_branch
        %173 = sbr.rel (%p171) target = $region20
      $region19: #{tpu_custom_call.1} parent=15 // pred_region
        %s174 = sadd.s32 %s16, %s17
        %p175 = scmp.lt.s32.totalorder %s174, 0
        %s176 = scalar_select %p175, %s174, 0
        %p177 = scmp.lt.s32.totalorder %s176, 0
        %s178 = scalar_select %p177, %s176, 0
        %p179 = scmp.lt.s32.totalorder %s18, 0
        %s180 = scalar_select %p179, %s18, 0
        %s181 = sadd.s32 %s180, %s178
        %s182 = smul.addr %s181, 8
        %s183 = scalar_lea.vmem %s0, %s182
        %s184 = sadd.s32 %s16, %s17
        %p185 = scmp.lt.s32.totalorder %s184, 0
        %s186 = scalar_select %p185, %s184, 0
      $region20: #{tpu_custom_call.1} parent=15 // pred_fallthru
        _
      // Predicated region
      $region21: #{tpu_custom_call.1} parent=15 // pred_check
        %p187 = pneg %p88
      $region22: #{tpu_custom_call.1} parent=15 // pred_check_branch
        %189 = sbr.rel (%p187) target = $region24
      $region23: #{tpu_custom_call.1} parent=15 // pred_region
        %s190 = sadd.s32 %s16, %s17
        %p191 = scmp.lt.s32.totalorder %s190, 0
        %s192 = scalar_select %p191, %s190, 0
        %p193 = scmp.lt.s32.totalorder %s192, 0
        %s194 = scalar_select %p193, %s192, 0
        %s195 = smul.addr %s194, 8
        %s196 = scalar_lea.vmem %s1, %s195
        %s197 = sadd.s32 %s16, %s17
        %p198 = scmp.lt.s32.totalorder %s197, 0
        %s199 = scalar_select %p198, %s197, 0
      $region24: #{tpu_custom_call.1} parent=15 // pred_fallthru
        _
      // Predicated region
      $region25: #{tpu_custom_call.1} parent=15 // pred_check
        %p200 = pneg %p120
      $region26: #{tpu_custom_call.1} parent=15 // pred_check_branch
        %202 = sbr.rel (%p200) target = $region28
      $region27: #{tpu_custom_call.1} parent=15 // pred_region
        %s203 = sadd.s32 %s16, %s17
        %p204 = scmp.lt.s32.totalorder %s203, 0
        %s205 = scalar_select %p204, %s203, 0
        %p206 = scmp.lt.s32.totalorder %s205, 0
        %s207 = scalar_select %p206, %s205, 0
        %s208 = smul.addr %s207, 8
        %s209 = scalar_lea.vmem %s2, %s208
        %s210 = sadd.s32 %s16, %s17
        %p211 = scmp.lt.s32.totalorder %s210, 0
        %s212 = scalar_select %p211, %s210, 0
      $region28: #{tpu_custom_call.1} parent=15 // pred_fallthru
        _
    $region16: #{tpu_custom_call.1} parent=5 // pred_fallthru
      _
    %p213 = scmp.le.s32.totalorder 1, %s9
    %p214 = scmp.lt.s32.totalorder %s9, 3
    %p215 = pnand %p213, %p214
    %p216 = pneg %p215
    // Predicated region
    $region29: #{tpu_custom_call.1} parent=5 // pred_check
      _
    $region30: #{tpu_custom_call.1} parent=5 // pred_check_branch
      %218 = sbr.rel (%p215) target = $region32
    $region31: #{tpu_custom_call.1} parent=5 // pred_region
      %s219 = ssub.s32 %s9, 1
      %s220 = sadd.s32 %s19, %s20
      %p221 = scmp.lt.s32.totalorder %s220, 0
      %s222 = scalar_select %p221, %s220, 0
      %p223 = scmp.lt.s32.totalorder %s222, 0
      %s224 = scalar_select %p223, %s222, 0
      %p225 = scmp.lt.s32.totalorder %s21, 0
      %s226 = scalar_select %p225, %s21, 0
      %s227 = sadd.s32 %s226, %s224
      %s228 = smul.addr %s227, 8
      %s229 = scalar_lea.vmem %s0, %s228
      %p230 = pneg %p62
      %p231 = pneg %p59
      %s232 = sadd.s32 %s19, %s20
      %p233 = scmp.lt.s32.totalorder %s232, 0
      %s234 = scalar_select %p233, %s232, 0
      %p235 = scmp.lt.s32.totalorder %s234, 0
      %s236 = scalar_select %p235, %s234, 0
      %s237 = smul.addr %s236, 8
      %s238 = scalar_lea.vmem %s1, %s237
      %p239 = pneg %p94
      %p240 = pneg %p91
      %s241 = sadd.s32 %s19, %s20
      %p242 = scmp.lt.s32.totalorder %s241, 0
      %s243 = scalar_select %p242, %s241, 0
      %p244 = scmp.lt.s32.totalorder %s243, 0
      %s245 = scalar_select %p244, %s243, 0
      %s246 = smul.addr %s245, 8
      %s247 = scalar_lea.vmem %s2, %s246
      %p248 = pneg %p126
      %p249 = pneg %p123
      %p250 = pneg %p152
      %p251 = pneg %p149
      %p252 = scmp.lt.s32.totalorder %s19, 1
      %s253 = scalar_select %p252, %s19, 1
      %s254 = scalar_lea.vmem %s3, %s253
      %s255 = sadd.s32 %s19, %s20
      %p256 = scmp.lt.s32.totalorder %s255, 0
      %s257 = scalar_select %p256, %s255, 0
      %p258 = scmp.lt.s32.totalorder %s257, 0
      %s259 = scalar_select %p258, %s257, 0
      %p260 = scmp.lt.s32.totalorder %s21, 0
      %s261 = scalar_select %p260, %s21, 0
      %s262 = sadd.s32 %s261, %s259
      %s263 = smul.addr %s262, 8
      %s264 = scalar_lea.vmem %s0, %s263
      %s265 = sadd.s32 %s19, %s20
      %p266 = scmp.lt.s32.totalorder %s265, 0
      %s267 = scalar_select %p266, %s265, 0
      %s268 = sadd.s32 %s19, %s20
      %p269 = scmp.lt.s32.totalorder %s268, 0
      %s270 = scalar_select %p269, %s268, 0
      %p271 = scmp.lt.s32.totalorder %s270, 0
      %s272 = scalar_select %p271, %s270, 0
      %s273 = smul.addr %s272, 8
      %s274 = scalar_lea.vmem %s1, %s273
      %s275 = sadd.s32 %s19, %s20
      %p276 = scmp.lt.s32.totalorder %s275, 0
      %s277 = scalar_select %p276, %s275, 0
      %s278 = sadd.s32 %s19, %s20
      %p279 = scmp.lt.s32.totalorder %s278, 0
      %s280 = scalar_select %p279, %s278, 0
      %p281 = scmp.lt.s32.totalorder %s280, 0
      %s282 = scalar_select %p281, %s280, 0
      %s283 = smul.addr %s282, 8
      %s284 = scalar_lea.vmem %s2, %s283
      %s285 = sadd.s32 %s19, %s20
      %p286 = scmp.lt.s32.totalorder %s285, 0
      %s287 = scalar_select %p286, %s285, 0
      %p288 = scmp.lt.s32.totalorder %s19, 1
      %s289 = scalar_select %p288, %s19, 1
      %s290 = scalar_lea.vmem %s3, %s289
      %p291 = scmp.eq.s32.totalorder %s20, 0
      %p292 = scmp.eq.s32.totalorder %s21, 0
      %p293 = pnand %p291, %p292
      %p294 = pneg %p293
      // Predicated region
      $region33: #{tpu_custom_call.1} parent=31 // pred_check
        _
      $region34: #{tpu_custom_call.1} parent=31 // pred_check_branch
        %296 = sbr.rel (%p293) target = $region36
      $region35: #{tpu_custom_call.1} parent=31 // pred_region
        %vm297 = vcmask 0
        %298 = vst.msk [vmem:[%s290] sm:$0x1] %vm297, 0.0
      $region36: #{tpu_custom_call.1} parent=31 // pred_fallthru
        _
      // Predicated region
      $region37: #{tpu_custom_call.1} parent=31 // pred_check
        %p299 = pneg %p292
      $region38: #{tpu_custom_call.1} parent=31 // pred_check_branch
        %301 = sbr.rel (%p299) target = $region40
      $region39: #{tpu_custom_call.1} parent=31 // pred_region
        %vm302 = vcmask 7168
        %303 = vst.msk [vmem:[#allocation2] sm:$0xff] %vm302, -inf
        %304 = vst.msk [vmem:[#allocation3] sm:$0xff] %vm302, 0.0
        %305 = vst.msk [vmem:[#allocation4] sm:$0xff] %vm302, 0.0
      $region40: #{tpu_custom_call.1} parent=31 // pred_fallthru
        _
      %v306 = vld [vmem:[%s264] sm:$0xff]
      %v307 = vld [vmem:[%s274] sm:$0xff]
      %s308 = smul.u32 %s21, 4
      %v309 = vlaneseq
      %v310 = vand.u32 %v309, 127
      %v311 = vstv %s308
      %v312 = vadd.s32 %v311, %v310
      %v313 = vld [vmem:[#allocation2] sm:$0xff]
      %vm314 = vcmask 31744
      %v315 = vsel %vm314, %v306, -inf
      %316 = vmax.xlane.f32.xlu0 %v315
      %v317 = vpop.xlane.xlu0 %316
      %v318 = vmax.f32 %v313, %v317
      %v319 = vld [vmem:[#allocation3] sm:$0xff]
      %v320 = vsub.f32 %v313, %v318
      %v321 = vmul.f32 %v320, 1.442695
      %v322 = vpow.pop %v321
      %v323 = vmul.f32 %v319, %v322
      %325 = vset.pattern.permute.xlu0 0
      %326 = vperm.xlu0 %325, %v318
      %v327 = vpop.permute.xlu0 %326
      %v329 = vsub.f32 %v306, %v327
      %v330 = vmul.f32 %v329, 1.442695
      %v331 = vpow.pop %v330
      %v332 = vsel %vm314, %v331, 0.0
      %333 = vadd.xlane.f32.xlu0 %v332
      %v334 = vpop.xlane.xlu0 %333
      %v335 = vadd.f32 %v323, %v334
      %vm336 = vcmask 7168
      %337 = vst.msk [vmem:[#allocation3] sm:$0xff] %vm336, %v335
      %338 = vst.msk [vmem:[#allocation2] sm:$0xff] %vm336, %v318
      %v339 = vld [vmem:[#allocation4] sm:$0xff]
      %340 = vset.pattern.permute.xlu0 0
      %341 = vperm.xlu0 %340, %v307
      %v342 = vpop.permute.xlu0 %341
      %vm343 = vcmp.eq.s32.totalorder %v312, %v342
      %v344 = vsel %vm343, %v306, 0.0
      %v345 = vsel %vm314, %v344, 0.0
      %346 = vadd.xlane.f32.xlu0 %v345
      %v347 = vpop.xlane.xlu0 %346
      %v348 = vadd.f32 %v339, %v347
      %349 = vst.msk [vmem:[#allocation4] sm:$0xff] %vm336, %v348
      // Predicated region
      $region41: #{tpu_custom_call.1} parent=31 // pred_check
        %p350 = pneg %p292
      $region42: #{tpu_custom_call.1} parent=31 // pred_check_branch
        %352 = sbr.rel (%p350) target = $region44
      $region43: #{tpu_custom_call.1} parent=31 // pred_region
        %v353 = vld [vmem:[%s284] sm:$0xff]
        %v354 = vld [vmem:[#allocation2] sm:$0xff]
        %v355 = vld [vmem:[#allocation3] sm:$0xff]
        %v356 = vlog2.pop %v355
        %v357 = vmul.f32 %v356, 0.6931472
        %v358 = vadd.f32 %v354, %v357
        %v359 = vld [vmem:[#allocation4] sm:$0xff]
        %v360 = vsub.f32 %v359, %v358
        %v361 = vmul.f32 %v360, 1.442695
        %v362 = vpow.pop %v361
        %v363 = vsub.f32 0.0, %v353
        %v364 = vsub.f32 1.0, %v362
        %v365 = vmul.f32 %v364, %v364
        %v366 = vmul.f32 %v363, %v365
        %v367 = vmul.f32 %v366, %v360
        %s368 = sadd.s32 %s19, %s20
        %s369 = smul.u32 %s368, 8
        %v370 = vlaneseq
        %v371 = vshrl.u32 %v370, 7
        %v372 = vstv %s369
        %v373 = vadd.s32 %v372, %v371
        %vm374 = vcmp.lt.s32.totalorder %v373, 8
        %v375 = vsel %vm374, %v367, 0.0
        %v376 = vld [vmem:[%s290] sm:$0x1]
        %v377 = vsel %vm336, %v375, 0.0
        %378 = vadd.xlane.f32.xlu0 %v377
        %v379 = vpop.xlane.xlu0 %378
        %v380 = vrot.slane %v379, 4
        %v381 = vadd.f32 %v379, %v380
        %v382 = vrot.slane %v381, 2
        %v383 = vadd.f32 %v381, %v382
        %v384 = vrot.slane %v383, 1
        %v385 = vadd.f32 %v383, %v384
        %s386 = vtos %v385
        %v387 = vstv %s386
        %v388 = vadd.f32 %v376, %v387
        %vm389 = vcmask 0
        %390 = vst.msk [vmem:[%s290] sm:$0x1] %vm389, %v388
      $region44: #{tpu_custom_call.1} parent=31 // pred_fallthru
        _
      %p391 = scmp.lt.s32.totalorder %s19, 1
      %s392 = scalar_select %p391, %s19, 1
      %s393 = scalar_lea.vmem %s3, %s392
      // Predicated region
      $region45: #{tpu_custom_call.1} parent=31 // pred_check
        %p394 = pneg %p149
      $region46: #{tpu_custom_call.1} parent=31 // pred_check_branch
        %396 = sbr.rel (%p394) target = $region48
      $region47: #{tpu_custom_call.1} parent=31 // pred_region
        _
      $region48: #{tpu_custom_call.1} parent=31 // pred_fallthru
        _
    $region32: #{tpu_custom_call.1} parent=5 // pred_fallthru
      _
    %p397 = scmp.le.s32.totalorder 2, %s9
    // Predicated region
    $region49: #{tpu_custom_call.1} parent=5 // pred_check
      %p398 = pneg %p397
    $region50: #{tpu_custom_call.1} parent=5 // pred_check_branch
      %400 = sbr.rel (%p398) target = $region52
    $region51: #{tpu_custom_call.1} parent=5 // pred_region
      %s401 = ssub.s32 %s9, 2
      // Predicated region
      $region53: #{tpu_custom_call.1} parent=51 // pred_check
        %p402 = pneg %p155
      $region54: #{tpu_custom_call.1} parent=51 // pred_check_branch
        %404 = sbr.rel (%p402) target = $region56
      $region55: #{tpu_custom_call.1} parent=51 // pred_region
        %p405 = scmp.lt.s32.totalorder %s22, 1
        %s406 = scalar_select %p405, %s22, 1
        %s407 = scalar_lea.vmem %s3, %s406
      $region56: #{tpu_custom_call.1} parent=51 // pred_fallthru
        _
    $region52: #{tpu_custom_call.1} parent=5 // pred_fallthru
      _
  $region6: #{tpu_custom_call.1} parent=0 // loop_footer
    %s13 = sadd.s32 1, %s9
  $region7: #{tpu_custom_call.1} parent=0 // loop_footer_branch
    %8 = sbr.rel target = $region3
  $region8: #{tpu_custom_call.1} parent=0 // loop_exit
    _

</llo_original>
